<compile_context>
chip_gen: v7x
topology: tpu7x:2x2x1
jax: 0.10.0
libtpu: 0.0.40
codegen_flags: <defaults>
</compile_context>

<pallas_src>
import functools

import jax
import jax.numpy as jnp
from jax.experimental import pallas as pl
from jax.experimental.pallas import tpu as pltpu


# ----------------------------- Pallas kernel -----------------------------

def image_cnn_kernel(x_ref, wT_ref, w2_ref, blin_ref, out_ref, *, n_off, npq_p, u_p):
    """Fused conv(+bias) + 2x2 max-pool + ReLU + flatten + linear.

    x_ref   : (n_off*NP, Kp) bf16  im2col rows; n_off pooling-offset blocks of NP = B*npq_p rows,
                                   row n = b*npq_p + pq; column K holds 1.0 on valid rows (bias
                                   column); padded rows/cols are exactly zero.
    wT_ref  : (Kp, O)        bf16  conv weight, row K = conv bias, remaining rows zero.
    w2_ref  : (O, F2p)       bf16  rearranged linear weight: w2[o, pq*u_p + u] = w_lin[u, o*npq+pq].
    blin_ref: (1, Up)        f32   zero-padded linear bias.
    out_ref : (Bp, Up)       f32   lane-dense padded output tile.
    """
    NP = x_ref.shape[0] // n_off          # rows per pooling-offset block (B * npq_p)
    F2p = w2_ref.shape[1]
    Bp, Up = out_ref.shape
    u_shift = u_p.bit_length() - 1        # log2(u_p)
    b_shift = npq_p.bit_length() - 1      # log2(npq_p)

    # --- Conv (+ folded bias) for all 4 pooling offsets: ONE bf16 MXU matmul. ---
    y = jnp.dot(x_ref[...], wT_ref[...], preferred_element_type=jnp.float32)   # (n_off*NP, O) f32

    # --- 2x2 max-pool = max over the offset blocks (sublane-aligned slices), then ReLU.
    #     relu(max_i(conv_i + b)) == maxpool(relu(conv + b)); zero-padded rows stay exactly 0. ---
    ymax = y[0:NP]
    for i in range(1, n_off):
        ymax = jnp.maximum(ymax, y[i * NP:(i + 1) * NP])
    pooled = jnp.maximum(ymax, 0.0)                                            # (NP, O) f32

    # --- Linear stage 1 (bf16 MXU): z[n, pq*u_p + u] = sum_o pooled[n,o] * w_lin[u, o*npq+pq]. ---
    z = jnp.dot(pooled.astype(jnp.bfloat16), w2_ref[...],
                preferred_element_type=jnp.float32)                            # (NP, F2p) f32

    # --- Keep only each row's own pq block (iota compare, shifts/ands only; no HBM constants). ---
    n_i = jax.lax.broadcasted_iota(jnp.int32, z.shape, 0)
    c_i = jax.lax.broadcasted_iota(jnp.int32, z.shape, 1)
    zm = jnp.where((c_i >> u_shift) == (n_i & (npq_p - 1)), z, 0.0)            # (NP, F2p) f32

    # --- Per-batch row sum with an in-kernel 0/1 selector (exact, tiny f32 matmul). ---
    sb = jax.lax.broadcasted_iota(jnp.int32, (Bp, NP), 0)
    sn = jax.lax.broadcasted_iota(jnp.int32, (Bp, NP), 1)
    sel = ((sn >> b_shift) == sb).astype(jnp.float32)                          # (Bp, NP)
    t = jnp.dot(sel, zm, preferred_element_type=jnp.float32)                   # (Bp, F2p) f32

    # --- Fold the npq_p blocks of u_p lanes onto the output lanes (in-kernel 0/1 fold). ---
    fr = jax.lax.broadcasted_iota(jnp.int32, (F2p, Up), 0)
    fc = jax.lax.broadcasted_iota(jnp.int32, (F2p, Up), 1)
    fold = ((fr & (u_p - 1)) == fc).astype(jnp.float32)                        # (F2p, Up)

    # Lane-dense (Bp, Up) store — single unmasked f32 tile.
    out_ref[...] = jnp.dot(t, fold, preferred_element_type=jnp.float32) + blin_ref[...]


# ----------------------------- Wrapper -----------------------------

def _round_up(x, m):
    return (x + m - 1) // m * m


def _next_pow2(n):
    return 1 << max(0, (n - 1).bit_length())


def image_cnn_forward(x, w_conv, b_conv, w_lin, b_lin, pool_kernel=(2, 2)):
    B, C, H, W = x.shape
    O, _, kh, kw = w_conv.shape
    ph, pw = pool_kernel
    U = w_lin.shape[0]

    outH, outW = H - kh + 1, W - kw + 1
    pH, pW = outH // ph, outW // pw
    n_off = ph * pw                       # pooling offsets (4)
    npq = pH * pW                         # pooled positions per image (25)
    npq_p = _next_pow2(npq)               # 32  (row stride per batch -> shift/and index math)
    K = C * kh * kw                       # 75
    Kp = _round_up(K + 1, 128)            # 128 (+1 = folded conv-bias column)
    u_p = _next_pow2(U)                   # 16  (lane stride per pq block)
    F2p = _round_up(npq_p * u_p, 128)     # 512
    Bp = _round_up(max(B, 8), 8)          # 8   (lane-dense output tile rows)
    Up = _round_up(max(U, 128), 128)      # 128 (lane-dense output tile lanes)

    # ---- im2col at trace level: ONE patches op on the tiny raw activation, emitted directly as
    #      the padded bf16 operand (no per-offset pad/transpose/concat chain).
    # TODO(synk): a fully in-kernel im2col (DMA gather from raw x) would also remove the ~12x
    #             activation-byte inflation; skipped to keep lowering simple at these shapes.
    patches = jax.lax.conv_general_dilated_patches(
        x, (kh, kw), (1, 1), "VALID",
        dimension_numbers=("NCHW", "OIHW", "NCHW"),
        precision=jax.lax.Precision.HIGHEST)                  # (B, K, outH, outW)
    patches = patches.reshape(B, K, pH, ph, pW, pw)
    patches = jnp.transpose(patches, (3, 5, 0, 2, 4, 1))      # (a, bb, B, p, q, K)
    x_off = patches.reshape(n_off, B, npq, K)
    ones = jnp.ones((n_off, B, npq, 1), x_off.dtype)          # folded conv-bias column (valid rows)
    x_off = jnp.concatenate([x_off, ones], axis=-1)           # (n_off, B, npq, K+1)
    x_off = jnp.pad(x_off, ((0, 0), (0, 0), (0, npq_p - npq), (0, Kp - (K + 1))))
    x_all = x_off.reshape(n_off * B * npq_p, Kp).astype(jnp.bfloat16)

    # ---- conv weight through the SAME patches op (guarantees matching feature order), bias folded.
    w_rows = jax.lax.conv_general_dilated_patches(
        w_conv, (kh, kw), (1, 1), "VALID",
        dimension_numbers=("NCHW", "OIHW", "NCHW"),
        precision=jax.lax.Precision.HIGHEST).reshape(O, K)    # (O, K)
    wT = jnp.concatenate([w_rows.T, b_conv.reshape(1, O)], axis=0)             # (K+1, O)
    wT = jnp.pad(wT, ((0, Kp - (K + 1)), (0, 0))).astype(jnp.bfloat16)         # (Kp, O)

    # ---- linear weight rearranged so no `rep` matmul is needed: w2[o, pq*u_p+u] = w_lin[u, o*npq+pq]
    w2 = jnp.transpose(w_lin.reshape(U, O, npq), (1, 2, 0))                    # (O, npq, U)
    w2 = jnp.pad(w2, ((0, 0), (0, npq_p - npq), (0, u_p - U))).reshape(O, npq_p * u_p)
    w2 = jnp.pad(w2, ((0, 0), (0, F2p - npq_p * u_p))).astype(jnp.bfloat16)    # (O, F2p)

    blin = jnp.pad(b_lin.reshape(1, U), ((0, 0), (0, Up - U))).astype(jnp.float32)

    kernel = functools.partial(image_cnn_kernel, n_off=n_off, npq_p=npq_p, u_p=u_p)
    vmem = pl.BlockSpec(memory_space=pltpu.MemorySpace.VMEM)
    # Single invocation (no grid): every operand fits VMEM with huge margin at these shapes.
    # For large batch (esp. v7x, 64 MiB VMEM / 2 TCs), add a grid over row blocks in multiples of
    # NP, pin wT/w2 with index_map -> (0, 0) and dimension_semantics=("parallel",).
    out_pad = pl.pallas_call(
        kernel,
        out_shape=jax.ShapeDtypeStruct((Bp, Up), jnp.float32),
        in_specs=[vmem] * 4,
        out_specs=vmem,
    )(x_all, wT, w2, blin)
    return out_pad[:B, :U]


# ----------------------------- Reference (plain JAX) -----------------------------

def reference_forward(x, w_conv, b_conv, w_lin, b_lin, pool_kernel=(2, 2)):
    B = x.shape[0]
    y = jax.lax.conv_general_dilated(
        x, w_conv, window_strides=(1, 1), padding="VALID",
        dimension_numbers=("NCHW", "OIHW", "NCHW"),
        precision=jax.lax.Precision.HIGHEST,
    ) + b_conv.reshape(1, -1, 1, 1)
    y = jnp.maximum(y, 0.0)
    ph, pw = pool_kernel
    y = jax.lax.reduce_window(
        y, -jnp.inf, jax.lax.max, (1, 1, ph, pw), (1, 1, ph, pw), "VALID"
    )
    return jnp.dot(y.reshape(B, -1), w_lin.T, precision=jax.lax.Precision.HIGHEST) + b_lin


# ----------------------------- Main -----------------------------

if __name__ == "__main__":
    # Shapes implied by the module: linear expects 16*5*5 = 400 features
    #   -> out_channels=16, pooled 5x5: input 14x14, conv 5x5 (-> 10x10), pool 2x2 (-> 5x5).
    B, C, H, W = 2, 3, 14, 14
    out_channels, num_outputs = 16, 10
    conv_kernel = (5, 5)
    pool_kernel = (2, 2)

    key = jax.random.PRNGKey(0)
    kx, kw1, kb1, kw2, kb2 = jax.random.split(key, 5)

    x = jax.random.normal(kx, (B, C, H, W), dtype=jnp.float32)
    w_conv = jax.random.normal(kw1, (out_channels, C, *conv_kernel), dtype=jnp.float32)
    b_conv = jax.random.normal(kb1, (out_channels,), dtype=jnp.float32)
    fan_in = out_channels * 5 * 5  # 400
    bound = 1.0 / jnp.sqrt(jnp.float32(fan_in))
    w_lin = jax.random.uniform(kw2, (num_outputs, fan_in), jnp.float32, -bound, bound)
    b_lin = jax.random.uniform(kb2, (num_outputs,), jnp.float32, -bound, bound)

    fwd = jax.jit(functools.partial(image_cnn_forward, pool_kernel=pool_kernel))
    out = jax.block_until_ready(fwd(x, w_conv, b_conv, w_lin, b_lin))

    ref = reference_forward(x, w_conv, b_conv, w_lin, b_lin, pool_kernel)
    assert out.shape == (B, num_outputs)
    # bf16 MXU operands (per perf review) -> looser tolerance vs the f32 reference.
    assert jnp.allclose(out, ref, rtol=2e-2, atol=2e-1), "mismatch vs reference"

    print("KERNEL_OK")
</pallas_src>

<mosaic_0001>
module attributes {stable_mosaic.version = 11 : i64} {
  func.func @image_cnn_kernel(%arg0: memref<256x128xbf16, #tpu.memory_space<vmem>>, %arg1: memref<128x16xbf16, #tpu.memory_space<vmem>>, %arg2: memref<16x512xbf16, #tpu.memory_space<vmem>>, %arg3: memref<1x128xf32, #tpu.memory_space<vmem>>, %arg4: memref<8x128xf32, #tpu.memory_space<vmem>>) attributes {dimension_semantics = [], scalar_prefetch = 0 : i64, scratch_operands = 0 : i64, tpu.core_type = #tpu.core_type<tc>} {
    %c0 = arith.constant 0 : index
    %c0_0 = arith.constant 0 : index
    %0 = vector.load %arg0[%c0, %c0_0] : memref<256x128xbf16, #tpu.memory_space<vmem>>, vector<256x128xbf16>
    %c0_1 = arith.constant 0 : index
    %c0_2 = arith.constant 0 : index
    %1 = vector.load %arg1[%c0_1, %c0_2] : memref<128x16xbf16, #tpu.memory_space<vmem>>, vector<128x16xbf16>
    %cst = arith.constant dense<0.000000e+00> : vector<256x16xf32>
    %2 = tpu.matmul %0, %1, %cst {dimension_numbers = #tpu.dot_dimension_numbers<[1], [0], [0], [1], [0, 0, 1, 1], [], []>} : vector<256x128xbf16>, vector<128x16xbf16>, vector<256x16xf32> -> vector<256x16xf32>
    %3 = vector.extract_strided_slice %2 {offsets = [0, 0], sizes = [64, 16], strides = [1, 1]} : vector<256x16xf32> to vector<64x16xf32>
    %4 = vector.extract_strided_slice %2 {offsets = [64, 0], sizes = [64, 16], strides = [1, 1]} : vector<256x16xf32> to vector<64x16xf32>
    %5 = arith.maximumf %3, %4 : vector<64x16xf32>
    %6 = vector.extract_strided_slice %2 {offsets = [128, 0], sizes = [64, 16], strides = [1, 1]} : vector<256x16xf32> to vector<64x16xf32>
    %7 = arith.maximumf %5, %6 : vector<64x16xf32>
    %8 = vector.extract_strided_slice %2 {offsets = [192, 0], sizes = [64, 16], strides = [1, 1]} : vector<256x16xf32> to vector<64x16xf32>
    %9 = arith.maximumf %7, %8 : vector<64x16xf32>
    %cst_3 = arith.constant 0.000000e+00 : f32
    %10 = vector.broadcast %cst_3 : f32 to vector<64x16xf32>
    %11 = arith.maximumf %9, %10 : vector<64x16xf32>
    %12 = arith.truncf %11 : vector<64x16xf32> to vector<64x16xbf16>
    %c0_4 = arith.constant 0 : index
    %c0_5 = arith.constant 0 : index
    %13 = vector.load %arg2[%c0_4, %c0_5] : memref<16x512xbf16, #tpu.memory_space<vmem>>, vector<16x512xbf16>
    %cst_6 = arith.constant dense<0.000000e+00> : vector<64x512xf32>
    %14 = tpu.matmul %12, %13, %cst_6 {dimension_numbers = #tpu.dot_dimension_numbers<[1], [0], [0], [1], [0, 0, 1, 1], [], []>} : vector<64x16xbf16>, vector<16x512xbf16>, vector<64x512xf32> -> vector<64x512xf32>
    %15 = tpu.iota {dimensions = array<i32: 0>} : vector<64x512xi32>
    %16 = tpu.iota {dimensions = array<i32: 1>} : vector<64x512xi32>
    %c4_i32 = arith.constant 4 : i32
    %17 = vector.broadcast %c4_i32 : i32 to vector<64x512xi32>
    %18 = arith.shrsi %16, %17 : vector<64x512xi32>
    %c31_i32 = arith.constant 31 : i32
    %19 = vector.broadcast %c31_i32 : i32 to vector<64x512xi32>
    %20 = arith.andi %15, %19 : vector<64x512xi32>
    %21 = arith.cmpi eq, %18, %20 : vector<64x512xi32>
    %cst_7 = arith.constant 0.000000e+00 : f32
    %22 = vector.broadcast %cst_7 : f32 to vector<64x512xf32>
    %23 = arith.select %21, %14, %22 : vector<64x512xi1>, vector<64x512xf32>
    %24 = tpu.iota {dimensions = array<i32: 0>} : vector<8x64xi32>
    %25 = tpu.iota {dimensions = array<i32: 1>} : vector<8x64xi32>
    %c5_i32 = arith.constant 5 : i32
    %26 = vector.broadcast %c5_i32 : i32 to vector<8x64xi32>
    %27 = arith.shrsi %25, %26 : vector<8x64xi32>
    %28 = arith.cmpi eq, %27, %24 : vector<8x64xi32>
    %29 = arith.extui %28 : vector<8x64xi1> to vector<8x64xi32>
    %30 = arith.sitofp %29 : vector<8x64xi32> to vector<8x64xf32>
    %cst_8 = arith.constant dense<0.000000e+00> : vector<8x512xf32>
    %31 = tpu.matmul %30, %23, %cst_8 {dimension_numbers = #tpu.dot_dimension_numbers<[1], [0], [0], [1], [0, 0, 1, 1], [], []>} : vector<8x64xf32>, vector<64x512xf32>, vector<8x512xf32> -> vector<8x512xf32>
    %32 = tpu.iota {dimensions = array<i32: 0>} : vector<512x128xi32>
    %33 = tpu.iota {dimensions = array<i32: 1>} : vector<512x128xi32>
    %c15_i32 = arith.constant 15 : i32
    %34 = vector.broadcast %c15_i32 : i32 to vector<512x128xi32>
    %35 = arith.andi %32, %34 : vector<512x128xi32>
    %36 = arith.cmpi eq, %35, %33 : vector<512x128xi32>
    %37 = arith.extui %36 : vector<512x128xi1> to vector<512x128xi32>
    %38 = arith.sitofp %37 : vector<512x128xi32> to vector<512x128xf32>
    %cst_9 = arith.constant dense<0.000000e+00> : vector<8x128xf32>
    %39 = tpu.matmul %31, %38, %cst_9 {dimension_numbers = #tpu.dot_dimension_numbers<[1], [0], [0], [1], [0, 0, 1, 1], [], []>} : vector<8x512xf32>, vector<512x128xf32>, vector<8x128xf32> -> vector<8x128xf32>
    %c0_10 = arith.constant 0 : index
    %c0_11 = arith.constant 0 : index
    %40 = vector.load %arg3[%c0_10, %c0_11] : memref<1x128xf32, #tpu.memory_space<vmem>>, vector<1x128xf32>
    %41 = vector.broadcast %40 : vector<1x128xf32> to vector<8x128xf32>
    %42 = arith.addf %39, %41 : vector<8x128xf32>
    %c0_12 = arith.constant 0 : index
    %c0_13 = arith.constant 0 : index
    %43 = vector.load %arg4[%c0_12, %c0_13] : memref<8x128xf32, #tpu.memory_space<vmem>>, vector<8x128xf32>
    tpu.vector_store %arg4[%c0_12, %c0_13], %42 {strides = array<i32>} : memref<8x128xf32, #tpu.memory_space<vmem>>, vector<8x128xf32>,
    return
  }
}

</mosaic_0001>

<llo_original>
// kernel: image_cnn_forward.1
$region0: #{image_cnn_forward.1}
  #allocation0 [shape = 'u32[]', space=smem, size = 0x4, offset = 0x4, fixed_abs, tag = 'smem constant byte address 0x4 - core index']
  #allocation1 [shape = 'u32[144,128]{1,0:T(1,128)}', space=vmem, size = 0x12000, scoped, tag = 'internal scratch']
  %s0 = inlined_call_operand.vmem [shape: bf16[256,128], index: 0, kind: input, shape index: {}]
  %s1 = inlined_call_operand.vmem [shape: bf16[128,16], index: 1, kind: input, shape index: {}]
  %s2 = inlined_call_operand.vmem [shape: bf16[16,512], index: 2, kind: input, shape index: {}]
  %s3 = inlined_call_operand.vmem [shape: f32[1,128], index: 3, kind: input, shape index: {}]
  %s4 = inlined_call_operand.vmem [shape: f32[8,128], index: 4, kind: output, shape index: {}]
  %s5 = sld [smem:[#allocation0]]
  $region26: #{image_cnn_forward.1} parent=0
    _
  %s7 = ssub.s32 1, %s5
  %s8 = scalar_select 0, %s7, %s5
  // Predicated region
  $region2: #{image_cnn_forward.1} parent=0 // pred_check
    _
  $region3: #{image_cnn_forward.1} parent=0 // pred_check_branch
    %10 = sbr.rel (0) target = $region5
  $region4: #{image_cnn_forward.1} parent=0 // pred_region
    _
  $region5: #{image_cnn_forward.1} parent=0 // pred_fallthru
    _
  // Predicated region
  $region6: #{image_cnn_forward.1} parent=0 // pred_check
    _
  $region7: #{image_cnn_forward.1} parent=0 // pred_check_branch
    %12 = sbr.rel (0) target = $region9
  $region8: #{image_cnn_forward.1} parent=0 // pred_region
    _
  $region9: #{image_cnn_forward.1} parent=0 // pred_fallthru
    _
  // Predicated region
  $region10: #{image_cnn_forward.1} parent=0 // pred_check
    _
  $region11: #{image_cnn_forward.1} parent=0 // pred_check_branch
    %14 = sbr.rel (0) target = $region13
  $region12: #{image_cnn_forward.1} parent=0 // pred_region
    _
  $region13: #{image_cnn_forward.1} parent=0 // pred_fallthru
    _
  // Predicated region
  $region14: #{image_cnn_forward.1} parent=0 // pred_check
    _
  $region15: #{image_cnn_forward.1} parent=0 // pred_check_branch
    %16 = sbr.rel (0) target = $region17
  $region16: #{image_cnn_forward.1} parent=0 // pred_region
    _
  $region17: #{image_cnn_forward.1} parent=0 // pred_fallthru
    _
  %v18 = vld [vmem:[%s0] sm:$0xf]
  %v19 = vld [vmem:[%s0 + $0x4] sm:$0xf]
  %v20 = vld [vmem:[%s0 + $0x8] sm:$0xf]
  %v21 = vld [vmem:[%s0 + $0xc] sm:$0xf]
  %v22 = vld [vmem:[%s0 + $0x10] sm:$0xf]
  %v23 = vld [vmem:[%s0 + $0x14] sm:$0xf]
  %v24 = vld [vmem:[%s0 + $0x18] sm:$0xf]
  %v25 = vld [vmem:[%s0 + $0x1c] sm:$0xf]
  %v26 = vld [vmem:[%s0 + $0x20] sm:$0xf]
  %v27 = vld [vmem:[%s0 + $0x24] sm:$0xf]
  %v28 = vld [vmem:[%s0 + $0x28] sm:$0xf]
  %v29 = vld [vmem:[%s0 + $0x2c] sm:$0xf]
  %v30 = vld [vmem:[%s0 + $0x30] sm:$0xf]
  %v31 = vld [vmem:[%s0 + $0x34] sm:$0xf]
  %v32 = vld [vmem:[%s0 + $0x38] sm:$0xf]
  %v33 = vld [vmem:[%s0 + $0x3c] sm:$0xf]
  %v34 = vld [vmem:[%s0 + $0x40] sm:$0xf]
  %v35 = vld [vmem:[%s0 + $0x44] sm:$0xf]
  %v36 = vld [vmem:[%s0 + $0x48] sm:$0xf]
  %v37 = vld [vmem:[%s0 + $0x4c] sm:$0xf]
  %v38 = vld [vmem:[%s0 + $0x50] sm:$0xf]
  %v39 = vld [vmem:[%s0 + $0x54] sm:$0xf]
  %v40 = vld [vmem:[%s0 + $0x58] sm:$0xf]
  %v41 = vld [vmem:[%s0 + $0x5c] sm:$0xf]
  %v42 = vld [vmem:[%s0 + $0x60] sm:$0xf]
  %v43 = vld [vmem:[%s0 + $0x64] sm:$0xf]
  %v44 = vld [vmem:[%s0 + $0x68] sm:$0xf]
  %v45 = vld [vmem:[%s0 + $0x6c] sm:$0xf]
  %v46 = vld [vmem:[%s0 + $0x70] sm:$0xf]
  %v47 = vld [vmem:[%s0 + $0x74] sm:$0xf]
  %v48 = vld [vmem:[%s0 + $0x78] sm:$0xf]
  %v49 = vld [vmem:[%s0 + $0x7c] sm:$0xf]
  %v50 = vld [vmem:[%s1] sm:$0xf]
  %v51 = vld [vmem:[%s1 + $0x4] sm:$0xf]
  %v52 = vld [vmem:[%s1 + $0x8] sm:$0xf]
  %v53 = vld [vmem:[%s1 + $0xc] sm:$0xf]
  %v54 = vld [vmem:[%s1 + $0x10] sm:$0xf]
  %v55 = vld [vmem:[%s1 + $0x14] sm:$0xf]
  %v56 = vld [vmem:[%s1 + $0x18] sm:$0xf]
  %v57 = vld [vmem:[%s1 + $0x1c] sm:$0xf]
  %v58 = vld [vmem:[%s1 + $0x20] sm:$0xf]
  %v59 = vld [vmem:[%s1 + $0x24] sm:$0xf]
  %v60 = vld [vmem:[%s1 + $0x28] sm:$0xf]
  %v61 = vld [vmem:[%s1 + $0x2c] sm:$0xf]
  %v62 = vld [vmem:[%s1 + $0x30] sm:$0xf]
  %v63 = vld [vmem:[%s1 + $0x34] sm:$0xf]
  %v64 = vld [vmem:[%s1 + $0x38] sm:$0xf]
  %v65 = vld [vmem:[%s1 + $0x3c] sm:$0xf]
  %v98 = vunpack.c.l.b16 %v18
  %v99 = vunpack.c.l.b16 %v19
  %v100 = vunpack.c.l.b16 %v20
  %v101 = vunpack.c.l.b16 %v21
  %v102 = vunpack.c.l.b16 %v22
  %v103 = vunpack.c.l.b16 %v23
  %v104 = vunpack.c.l.b16 %v24
  %v105 = vunpack.c.l.b16 %v25
  %v106 = vunpack.c.l.b16 %v26
  %v107 = vunpack.c.l.b16 %v27
  %v108 = vunpack.c.l.b16 %v28
  %v109 = vunpack.c.l.b16 %v29
  %v110 = vunpack.c.l.b16 %v30
  %v111 = vunpack.c.l.b16 %v31
  %v112 = vunpack.c.l.b16 %v32
  %v113 = vunpack.c.l.b16 %v33
  %v114 = vunpack.c.l.b16 %v34
  %v115 = vunpack.c.l.b16 %v35
  %v116 = vunpack.c.l.b16 %v36
  %v117 = vunpack.c.l.b16 %v37
  %v118 = vunpack.c.l.b16 %v38
  %v119 = vunpack.c.l.b16 %v39
  %v120 = vunpack.c.l.b16 %v40
  %v121 = vunpack.c.l.b16 %v41
  %v122 = vunpack.c.l.b16 %v42
  %v123 = vunpack.c.l.b16 %v43
  %v124 = vunpack.c.l.b16 %v44
  %v125 = vunpack.c.l.b16 %v45
  %v126 = vunpack.c.l.b16 %v46
  %v127 = vunpack.c.l.b16 %v47
  %v128 = vunpack.c.l.b16 %v48
  %v129 = vunpack.c.l.b16 %v49
  %v130 = vpack.c.b16 %v99, %v98
  %v131 = vpack.c.b16 %v101, %v100
  %v132 = vpack.c.b16 %v103, %v102
  %v133 = vpack.c.b16 %v105, %v104
  %v134 = vpack.c.b16 %v107, %v106
  %v135 = vpack.c.b16 %v109, %v108
  %v136 = vpack.c.b16 %v111, %v110
  %v137 = vpack.c.b16 %v113, %v112
  %v138 = vpack.c.b16 %v115, %v114
  %v139 = vpack.c.b16 %v117, %v116
  %v140 = vpack.c.b16 %v119, %v118
  %v141 = vpack.c.b16 %v121, %v120
  %v142 = vpack.c.b16 %v123, %v122
  %v143 = vpack.c.b16 %v125, %v124
  %v144 = vpack.c.b16 %v127, %v126
  %v145 = vpack.c.b16 %v129, %v128
  %v178 = vunpack.c.l.b16 %v50
  %v179 = vunpack.c.l.b16 %v51
  %v180 = vunpack.c.l.b16 %v52
  %v181 = vunpack.c.l.b16 %v53
  %v182 = vunpack.c.l.b16 %v54
  %v183 = vunpack.c.l.b16 %v55
  %v184 = vunpack.c.l.b16 %v56
  %v185 = vunpack.c.l.b16 %v57
  %v186 = vunpack.c.l.b16 %v58
  %v187 = vunpack.c.l.b16 %v59
  %v188 = vunpack.c.l.b16 %v60
  %v189 = vunpack.c.l.b16 %v61
  %v190 = vunpack.c.l.b16 %v62
  %v191 = vunpack.c.l.b16 %v63
  %v192 = vunpack.c.l.b16 %v64
  %v193 = vunpack.c.l.b16 %v65
  %v194 = vpack.c.b16 %v179, %v178
  %v195 = vpack.c.b16 %v181, %v180
  %v196 = vpack.c.b16 %v183, %v182
  %v197 = vpack.c.b16 %v185, %v184
  %v198 = vpack.c.b16 %v187, %v186
  %v199 = vpack.c.b16 %v189, %v188
  %v200 = vpack.c.b16 %v191, %v190
  %v201 = vpack.c.b16 %v193, %v192
  %210 = vmatprep.subr.bf16.mxu0 0
  %211 = vmatpush1.bf16.msra.mxu0 %v194
  %212 = vmatprep.subr.bf16.mxu0 0
  %213 = vmatpush1.bf16.msra.mxu0 %v195
  %214 = vmatprep.subr.bf16.mxu0 0
  %215 = vmatpush1.bf16.msra.mxu0 %v196
  %216 = vmatprep.subr.bf16.mxu0 0
  %217 = vmatpush1.bf16.msra.mxu0 %v197
  %218 = vmatprep.subr.bf16.mxu0 0
  %219 = vmatpush1.bf16.msra.mxu0 %v198
  %220 = vmatprep.subr.bf16.mxu0 0
  %221 = vmatpush1.bf16.msra.mxu0 %v199
  %222 = vmatprep.subr.bf16.mxu0 0
  %223 = vmatpush1.bf16.msra.mxu0 %v200
  %224 = vmatprep.subr.bf16.mxu0 0
  %225 = vmatpush1.bf16.msra.mxu0 %v201
  %226 = vmatprep.subr.bf16.mxu0 0
  %227 = vmatpush1.bf16.msra.mxu0 0
  %228 = vmatprep.subr.bf16.mxu0 0
  %229 = vmatpush1.bf16.msra.mxu0 0
  %230 = vmatprep.subr.bf16.mxu0 0
  %231 = vmatpush1.bf16.msra.mxu0 0
  %232 = vmatprep.subr.bf16.mxu0 0
  %233 = vmatpush1.bf16.msra.mxu0 0
  %234 = vmatprep.subr.bf16.mxu0 0
  %235 = vmatpush1.bf16.msra.mxu0 0
  %236 = vmatprep.subr.bf16.mxu0 0
  %237 = vmatpush1.bf16.msra.mxu0 0
  %238 = vmatprep.subr.bf16.mxu0 0
  %239 = vmatpush1.bf16.msra.mxu0 0
  %240 = vmatprep.subr.bf16.mxu0 0
  %241 = vmatpush1.bf16.msra.mxu0 0
  %242 = vmatprep.mubr.bf16.mxu0 0
  %243 = vmatmul.mubr.bf16.gmra.mrb[0].mxu0 %v130
  %v244 = vpop.f32.mrb[0].mxu0
  %v245 = vadd.f32 0.0, %v244
  %v246 = vpop.f32.mrb[0].mxu0
  %v247 = vpop.f32.mrb[0].mxu0
  %v248 = vadd.f32 0.0, %v247
  %v249 = vpop.f32.mrb[0].mxu0
  %250 = vmatprep.mubr.bf16.mxu0 0
  %251 = vmatmul.mubr.bf16.gmra.mrb[0].mxu0 %v131
  %v252 = vpop.f32.mrb[0].mxu0
  %v253 = vadd.f32 0.0, %v252
  %v254 = vpop.f32.mrb[0].mxu0
  %v255 = vpop.f32.mrb[0].mxu0
  %v256 = vadd.f32 0.0, %v255
  %v257 = vpop.f32.mrb[0].mxu0
  %258 = vmatprep.mubr.bf16.mxu0 0
  %259 = vmatmul.mubr.bf16.gmra.mrb[0].mxu0 %v132
  %v260 = vpop.f32.mrb[0].mxu0
  %v261 = vadd.f32 0.0, %v260
  %v262 = vpop.f32.mrb[0].mxu0
  %v263 = vpop.f32.mrb[0].mxu0
  %v264 = vadd.f32 0.0, %v263
  %v265 = vpop.f32.mrb[0].mxu0
  %266 = vmatprep.mubr.bf16.mxu0 0
  %267 = vmatmul.mubr.bf16.gmra.mrb[0].mxu0 %v133
  %v268 = vpop.f32.mrb[0].mxu0
  %v269 = vadd.f32 0.0, %v268
  %v270 = vpop.f32.mrb[0].mxu0
  %v271 = vpop.f32.mrb[0].mxu0
  %v272 = vadd.f32 0.0, %v271
  %v273 = vpop.f32.mrb[0].mxu0
  %274 = vmatprep.mubr.bf16.mxu0 0
  %275 = vmatmul.mubr.bf16.gmra.mrb[0].mxu0 %v134
  %v276 = vpop.f32.mrb[0].mxu0
  %v277 = vadd.f32 0.0, %v276
  %v278 = vpop.f32.mrb[0].mxu0
  %v279 = vpop.f32.mrb[0].mxu0
  %v280 = vadd.f32 0.0, %v279
  %v281 = vpop.f32.mrb[0].mxu0
  %282 = vmatprep.mubr.bf16.mxu0 0
  %283 = vmatmul.mubr.bf16.gmra.mrb[0].mxu0 %v135
  %v284 = vpop.f32.mrb[0].mxu0
  %v285 = vadd.f32 0.0, %v284
  %v286 = vpop.f32.mrb[0].mxu0
  %v287 = vpop.f32.mrb[0].mxu0
  %v288 = vadd.f32 0.0, %v287
  %v289 = vpop.f32.mrb[0].mxu0
  %290 = vmatprep.mubr.bf16.mxu0 0
  %291 = vmatmul.mubr.bf16.gmra.mrb[0].mxu0 %v136
  %v292 = vpop.f32.mrb[0].mxu0
  %v293 = vadd.f32 0.0, %v292
  %v294 = vpop.f32.mrb[0].mxu0
  %v295 = vpop.f32.mrb[0].mxu0
  %v296 = vadd.f32 0.0, %v295
  %v297 = vpop.f32.mrb[0].mxu0
  %298 = vmatprep.mubr.bf16.mxu0 0
  %299 = vmatmul.mubr.bf16.gmra.mrb[0].mxu0 %v137
  %v300 = vpop.f32.mrb[0].mxu0
  %v301 = vadd.f32 0.0, %v300
  %v302 = vpop.f32.mrb[0].mxu0
  %v303 = vpop.f32.mrb[0].mxu0
  %v304 = vadd.f32 0.0, %v303
  %v305 = vpop.f32.mrb[0].mxu0
  %306 = vmatprep.mubr.bf16.mxu0 0
  %307 = vmatmul.mubr.bf16.gmra.mrb[0].mxu0 %v138
  %v308 = vpop.f32.mrb[0].mxu0
  %v309 = vadd.f32 0.0, %v308
  %v310 = vpop.f32.mrb[0].mxu0
  %v311 = vpop.f32.mrb[0].mxu0
  %v312 = vadd.f32 0.0, %v311
  %v313 = vpop.f32.mrb[0].mxu0
  %314 = vmatprep.mubr.bf16.mxu0 0
  %315 = vmatmul.mubr.bf16.gmra.mrb[0].mxu0 %v139
  %v316 = vpop.f32.mrb[0].mxu0
  %v317 = vadd.f32 0.0, %v316
  %v318 = vpop.f32.mrb[0].mxu0
  %v319 = vpop.f32.mrb[0].mxu0
  %v320 = vadd.f32 0.0, %v319
  %v321 = vpop.f32.mrb[0].mxu0
  %322 = vmatprep.mubr.bf16.mxu0 0
  %323 = vmatmul.mubr.bf16.gmra.mrb[0].mxu0 %v140
  %v324 = vpop.f32.mrb[0].mxu0
  %v325 = vadd.f32 0.0, %v324
  %v326 = vpop.f32.mrb[0].mxu0
  %v327 = vpop.f32.mrb[0].mxu0
  %v328 = vadd.f32 0.0, %v327
  %v329 = vpop.f32.mrb[0].mxu0
  %330 = vmatprep.mubr.bf16.mxu0 0
  %331 = vmatmul.mubr.bf16.gmra.mrb[0].mxu0 %v141
  %v332 = vpop.f32.mrb[0].mxu0
  %v333 = vadd.f32 0.0, %v332
  %v334 = vpop.f32.mrb[0].mxu0
  %v335 = vpop.f32.mrb[0].mxu0
  %v336 = vadd.f32 0.0, %v335
  %v337 = vpop.f32.mrb[0].mxu0
  %338 = vmatprep.mubr.bf16.mxu0 0
  %339 = vmatmul.mubr.bf16.gmra.mrb[0].mxu0 %v142
  %v340 = vpop.f32.mrb[0].mxu0
  %v341 = vadd.f32 0.0, %v340
  %v342 = vpop.f32.mrb[0].mxu0
  %v343 = vpop.f32.mrb[0].mxu0
  %v344 = vadd.f32 0.0, %v343
  %v345 = vpop.f32.mrb[0].mxu0
  %346 = vmatprep.mubr.bf16.mxu0 0
  %347 = vmatmul.mubr.bf16.gmra.mrb[0].mxu0 %v143
  %v348 = vpop.f32.mrb[0].mxu0
  %v349 = vadd.f32 0.0, %v348
  %v350 = vpop.f32.mrb[0].mxu0
  %v351 = vpop.f32.mrb[0].mxu0
  %v352 = vadd.f32 0.0, %v351
  %v353 = vpop.f32.mrb[0].mxu0
  %354 = vmatprep.mubr.bf16.mxu0 0
  %355 = vmatmul.mubr.bf16.gmra.mrb[0].mxu0 %v144
  %v356 = vpop.f32.mrb[0].mxu0
  %v357 = vadd.f32 0.0, %v356
  %v358 = vpop.f32.mrb[0].mxu0
  %v359 = vpop.f32.mrb[0].mxu0
  %v360 = vadd.f32 0.0, %v359
  %v361 = vpop.f32.mrb[0].mxu0
  %362 = vmatprep.mubr.bf16.mxu0 0
  %363 = vmatmul.mubr.bf16.gmra.mrb[0].mxu0 %v145
  %v364 = vpop.f32.mrb[0].mxu0
  %v365 = vadd.f32 0.0, %v364
  %v366 = vpop.f32.mrb[0].mxu0
  %v367 = vpop.f32.mrb[0].mxu0
  %v368 = vadd.f32 0.0, %v367
  %v369 = vpop.f32.mrb[0].mxu0
  %370 = vdwg.mxu0
  %v371 = vmax.f32 %v245, %v277
  %v372 = vmax.f32 %v248, %v280
  %v373 = vmax.f32 %v253, %v285
  %v374 = vmax.f32 %v256, %v288
  %v375 = vmax.f32 %v261, %v293
  %v376 = vmax.f32 %v264, %v296
  %v377 = vmax.f32 %v269, %v301
  %v378 = vmax.f32 %v272, %v304
  %v379 = vmax.f32 %v371, %v309
  %v380 = vmax.f32 %v372, %v312
  %v381 = vmax.f32 %v373, %v317
  %v382 = vmax.f32 %v374, %v320
  %v383 = vmax.f32 %v375, %v325
  %v384 = vmax.f32 %v376, %v328
  %v385 = vmax.f32 %v377, %v333
  %v386 = vmax.f32 %v378, %v336
  %v387 = vmax.f32 %v379, %v341
  %v388 = vmax.f32 %v380, %v344
  %v389 = vmax.f32 %v381, %v349
  %v390 = vmax.f32 %v382, %v352
  %v391 = vmax.f32 %v383, %v357
  %v392 = vmax.f32 %v384, %v360
  %v393 = vmax.f32 %v385, %v365
  %v394 = vmax.f32 %v386, %v368
  %v395 = vmax.f32 %v387, 0.0
  %v396 = vmax.f32 %v388, 0.0
  %v397 = vmax.f32 %v389, 0.0
  %v398 = vmax.f32 %v390, 0.0
  %v399 = vmax.f32 %v391, 0.0
  %v400 = vmax.f32 %v392, 0.0
  %v401 = vmax.f32 %v393, 0.0
  %v402 = vmax.f32 %v394, 0.0
  %v403 = vpack.c.bf16 %v396, %v395
  %v404 = vpack.c.bf16 %v398, %v397
  %v405 = vpack.c.bf16 %v400, %v399
  %v406 = vpack.c.bf16 %v402, %v401
  %v407 = vld [vmem:[%s2] sm:$0xff]
  %v408 = vld [vmem:[%s2 + $0x8] sm:$0xff]
  %v409 = vld [vmem:[%s2 + $0x10] sm:$0xff]
  %v410 = vld [vmem:[%s2 + $0x18] sm:$0xff]
  %v415 = vunpack.c.l.b16 %v407
  %v416 = vunpack.c.h.b16 %v407
  %v417 = vunpack.c.l.b16 %v408
  %v418 = vunpack.c.h.b16 %v408
  %v419 = vunpack.c.l.b16 %v409
  %v420 = vunpack.c.h.b16 %v409
  %v421 = vunpack.c.l.b16 %v410
  %v422 = vunpack.c.h.b16 %v410
  %v423 = vpack.c.b16 %v419, %v415
  %v424 = vpack.c.b16 %v420, %v416
  %v425 = vpack.c.b16 %v421, %v417
  %v426 = vpack.c.b16 %v422, %v418
  %vm431 = vcmask 130048
  %v433 = vsel %vm431, %v403, 0
  %v436 = vsel %vm431, %v404, 0
  %v439 = vsel %vm431, %v405, 0
  %v442 = vsel %vm431, %v406, 0
  %444 = vmatprep.subr.bf16.mxu0 %v424
  %445 = vmatpush1.bf16.msra.mxu0 %v423
  %446 = vmatprep.subr.bf16.mxu0 0
  %447 = vmatpush1.bf16.msra.mxu0 0
  %448 = vmatprep.subr.bf16.mxu0 0
  %449 = vmatpush1.bf16.msra.mxu0 0
  %450 = vmatprep.subr.bf16.mxu0 0
  %451 = vmatpush1.bf16.msra.mxu0 0
  %452 = vmatprep.subr.bf16.mxu0 0
  %453 = vmatpush1.bf16.msra.mxu0 0
  %454 = vmatprep.subr.bf16.mxu0 0
  %455 = vmatpush1.bf16.msra.mxu0 0
  %456 = vmatprep.subr.bf16.mxu0 0
  %457 = vmatpush1.bf16.msra.mxu0 0
  %458 = vmatprep.subr.bf16.mxu0 0
  %459 = vmatpush1.bf16.msra.mxu0 0
  %460 = vmatprep.subr.bf16.mxu0 0
  %461 = vmatpush1.bf16.msra.mxu0 0
  %462 = vmatprep.subr.bf16.mxu0 0
  %463 = vmatpush1.bf16.msra.mxu0 0
  %464 = vmatprep.subr.bf16.mxu0 0
  %465 = vmatpush1.bf16.msra.mxu0 0
  %466 = vmatprep.subr.bf16.mxu0 0
  %467 = vmatpush1.bf16.msra.mxu0 0
  %468 = vmatprep.subr.bf16.mxu0 0
  %469 = vmatpush1.bf16.msra.mxu0 0
  %470 = vmatprep.subr.bf16.mxu0 0
  %471 = vmatpush1.bf16.msra.mxu0 0
  %472 = vmatprep.subr.bf16.mxu0 0
  %473 = vmatpush1.bf16.msra.mxu0 0
  %474 = vmatprep.subr.bf16.mxu0 0
  %475 = vmatpush1.bf16.msra.mxu0 0
  %476 = vmatprep.mubr.bf16.mxu0 0
  %477 = vmatmul.mubr.bf16.gmra.mrb[0].mxu0 %v433
  %v478 = vpop.f32.mrb[0].mxu0
  %v479 = vadd.f32 0.0, %v478
  %v480 = vpop.f32.mrb[0].mxu0
  %v481 = vadd.f32 0.0, %v480
  %v482 = vpop.f32.mrb[0].mxu0
  %v483 = vadd.f32 0.0, %v482
  %v484 = vpop.f32.mrb[0].mxu0
  %v485 = vadd.f32 0.0, %v484
  %486 = vmatprep.mubr.bf16.mxu0 0
  %487 = vmatmul.mubr.bf16.gmra.mrb[0].mxu0 %v436
  %v488 = vpop.f32.mrb[0].mxu0
  %v489 = vadd.f32 0.0, %v488
  %v490 = vpop.f32.mrb[0].mxu0
  %v491 = vadd.f32 0.0, %v490
  %v492 = vpop.f32.mrb[0].mxu0
  %v493 = vadd.f32 0.0, %v492
  %v494 = vpop.f32.mrb[0].mxu0
  %v495 = vadd.f32 0.0, %v494
  %496 = vmatprep.mubr.bf16.mxu0 0
  %497 = vmatmul.mubr.bf16.gmra.mrb[0].mxu0 %v439
  %v498 = vpop.f32.mrb[0].mxu0
  %v499 = vadd.f32 0.0, %v498
  %v500 = vpop.f32.mrb[0].mxu0
  %v501 = vadd.f32 0.0, %v500
  %v502 = vpop.f32.mrb[0].mxu0
  %v503 = vadd.f32 0.0, %v502
  %v504 = vpop.f32.mrb[0].mxu0
  %v505 = vadd.f32 0.0, %v504
  %506 = vmatprep.mubr.bf16.mxu0 0
  %507 = vmatmul.mubr.bf16.gmra.mrb[0].mxu0 %v442
  %v508 = vpop.f32.mrb[0].mxu0
  %v509 = vadd.f32 0.0, %v508
  %v510 = vpop.f32.mrb[0].mxu0
  %v511 = vadd.f32 0.0, %v510
  %v512 = vpop.f32.mrb[0].mxu0
  %v513 = vadd.f32 0.0, %v512
  %v514 = vpop.f32.mrb[0].mxu0
  %v515 = vadd.f32 0.0, %v514
  %516 = vdwg.mxu0
  %517 = vmatprep.subr.bf16.mxu0 %v426
  %518 = vmatpush1.bf16.msra.mxu0 %v425
  %519 = vmatprep.subr.bf16.mxu0 0
  %520 = vmatpush1.bf16.msra.mxu0 0
  %521 = vmatprep.subr.bf16.mxu0 0
  %522 = vmatpush1.bf16.msra.mxu0 0
  %523 = vmatprep.subr.bf16.mxu0 0
  %524 = vmatpush1.bf16.msra.mxu0 0
  %525 = vmatprep.subr.bf16.mxu0 0
  %526 = vmatpush1.bf16.msra.mxu0 0
  %527 = vmatprep.subr.bf16.mxu0 0
  %528 = vmatpush1.bf16.msra.mxu0 0
  %529 = vmatprep.subr.bf16.mxu0 0
  %530 = vmatpush1.bf16.msra.mxu0 0
  %531 = vmatprep.subr.bf16.mxu0 0
  %532 = vmatpush1.bf16.msra.mxu0 0
  %533 = vmatprep.subr.bf16.mxu0 0
  %534 = vmatpush1.bf16.msra.mxu0 0
  %535 = vmatprep.subr.bf16.mxu0 0
  %536 = vmatpush1.bf16.msra.mxu0 0
  %537 = vmatprep.subr.bf16.mxu0 0
  %538 = vmatpush1.bf16.msra.mxu0 0
  %539 = vmatprep.subr.bf16.mxu0 0
  %540 = vmatpush1.bf16.msra.mxu0 0
  %541 = vmatprep.subr.bf16.mxu0 0
  %542 = vmatpush1.bf16.msra.mxu0 0
  %543 = vmatprep.subr.bf16.mxu0 0
  %544 = vmatpush1.bf16.msra.mxu0 0
  %545 = vmatprep.subr.bf16.mxu0 0
  %546 = vmatpush1.bf16.msra.mxu0 0
  %547 = vmatprep.subr.bf16.mxu0 0
  %548 = vmatpush1.bf16.msra.mxu0 0
  %549 = vmatprep.mubr.bf16.mxu0 0
  %550 = vmatmul.mubr.bf16.gmra.mrb[0].mxu0 %v433
  %v551 = vpop.f32.mrb[0].mxu0
  %v552 = vadd.f32 0.0, %v551
  %v553 = vpop.f32.mrb[0].mxu0
  %v554 = vadd.f32 0.0, %v553
  %v555 = vpop.f32.mrb[0].mxu0
  %v556 = vadd.f32 0.0, %v555
  %v557 = vpop.f32.mrb[0].mxu0
  %v558 = vadd.f32 0.0, %v557
  %559 = vmatprep.mubr.bf16.mxu0 0
  %560 = vmatmul.mubr.bf16.gmra.mrb[0].mxu0 %v436
  %v561 = vpop.f32.mrb[0].mxu0
  %v562 = vadd.f32 0.0, %v561
  %v563 = vpop.f32.mrb[0].mxu0
  %v564 = vadd.f32 0.0, %v563
  %v565 = vpop.f32.mrb[0].mxu0
  %v566 = vadd.f32 0.0, %v565
  %v567 = vpop.f32.mrb[0].mxu0
  %v568 = vadd.f32 0.0, %v567
  %569 = vmatprep.mubr.bf16.mxu0 0
  %570 = vmatmul.mubr.bf16.gmra.mrb[0].mxu0 %v439
  %v571 = vpop.f32.mrb[0].mxu0
  %v572 = vadd.f32 0.0, %v571
  %v573 = vpop.f32.mrb[0].mxu0
  %v574 = vadd.f32 0.0, %v573
  %v575 = vpop.f32.mrb[0].mxu0
  %v576 = vadd.f32 0.0, %v575
  %v577 = vpop.f32.mrb[0].mxu0
  %v578 = vadd.f32 0.0, %v577
  %579 = vmatprep.mubr.bf16.mxu0 0
  %580 = vmatmul.mubr.bf16.gmra.mrb[0].mxu0 %v442
  %v581 = vpop.f32.mrb[0].mxu0
  %v582 = vadd.f32 0.0, %v581
  %v583 = vpop.f32.mrb[0].mxu0
  %v584 = vadd.f32 0.0, %v583
  %v585 = vpop.f32.mrb[0].mxu0
  %v586 = vadd.f32 0.0, %v585
  %v587 = vpop.f32.mrb[0].mxu0
  %v588 = vadd.f32 0.0, %v587
  %589 = vdwg.mxu0
  %v590 = vlaneseq
  %v591 = vshrl.u32 %v590, 7
  %v592 = vadd.s32 %v591, 8
  %v593 = vadd.s32 %v591, 16
  %v594 = vadd.s32 %v591, 24
  %v595 = vadd.s32 %v591, 32
  %v596 = vadd.s32 %v591, 40
  %v597 = vadd.s32 %v591, 48
  %v598 = vadd.s32 %v591, 56
  %v599 = vlaneseq
  %v600 = vand.u32 %v599, 127
  %v601 = vadd.s32 %v600, 128
  %v602 = vadd.s32 %v600, 256
  %v603 = vadd.s32 %v600, 384
  %v604 = vshra.s32 %v600, 4
  %v605 = vshra.s32 %v601, 4
  %v606 = vshra.s32 %v602, 4
  %v607 = vshra.s32 %v603, 4
  %v608 = vand.u32 %v591, 31
  %v609 = vand.u32 %v592, 31
  %v610 = vand.u32 %v593, 31
  %v611 = vand.u32 %v594, 31
  %v612 = vand.u32 %v595, 31
  %v613 = vand.u32 %v596, 31
  %v614 = vand.u32 %v597, 31
  %v615 = vand.u32 %v598, 31
  %vm616 = vcmp.eq.s32.totalorder %v604, %v608
  %vm617 = vcmp.eq.s32.totalorder %v605, %v608
  %vm618 = vcmp.eq.s32.totalorder %v606, %v608
  %vm619 = vcmp.eq.s32.totalorder %v607, %v608
  %vm620 = vcmp.eq.s32.totalorder %v604, %v609
  %vm621 = vcmp.eq.s32.totalorder %v605, %v609
  %vm622 = vcmp.eq.s32.totalorder %v606, %v609
  %vm623 = vcmp.eq.s32.totalorder %v607, %v609
  %vm624 = vcmp.eq.s32.totalorder %v604, %v610
  %vm625 = vcmp.eq.s32.totalorder %v605, %v610
  %vm626 = vcmp.eq.s32.totalorder %v606, %v610
  %vm627 = vcmp.eq.s32.totalorder %v607, %v610
  %vm628 = vcmp.eq.s32.totalorder %v604, %v611
  %vm629 = vcmp.eq.s32.totalorder %v605, %v611
  %vm630 = vcmp.eq.s32.totalorder %v606, %v611
  %vm631 = vcmp.eq.s32.totalorder %v607, %v611
  %vm632 = vcmp.eq.s32.totalorder %v604, %v612
  %vm633 = vcmp.eq.s32.totalorder %v605, %v612
  %vm634 = vcmp.eq.s32.totalorder %v606, %v612
  %vm635 = vcmp.eq.s32.totalorder %v607, %v612
  %vm636 = vcmp.eq.s32.totalorder %v604, %v613
  %vm637 = vcmp.eq.s32.totalorder %v605, %v613
  %vm638 = vcmp.eq.s32.totalorder %v606, %v613
  %vm639 = vcmp.eq.s32.totalorder %v607, %v613
  %vm640 = vcmp.eq.s32.totalorder %v604, %v614
  %vm641 = vcmp.eq.s32.totalorder %v605, %v614
  %vm642 = vcmp.eq.s32.totalorder %v606, %v614
  %vm643 = vcmp.eq.s32.totalorder %v607, %v614
  %vm644 = vcmp.eq.s32.totalorder %v604, %v615
  %vm645 = vcmp.eq.s32.totalorder %v605, %v615
  %vm646 = vcmp.eq.s32.totalorder %v606, %v615
  %vm647 = vcmp.eq.s32.totalorder %v607, %v615
  %v648 = vsel %vm616, %v479, 0.0
  %v649 = vsel %vm617, %v481, 0.0
  %v650 = vsel %vm618, %v552, 0.0
  %v651 = vsel %vm619, %v554, 0.0
  %v652 = vsel %vm620, %v483, 0.0
  %v653 = vsel %vm621, %v485, 0.0
  %v654 = vsel %vm622, %v556, 0.0
  %v655 = vsel %vm623, %v558, 0.0
  %v656 = vsel %vm624, %v489, 0.0
  %v657 = vsel %vm625, %v491, 0.0
  %v658 = vsel %vm626, %v562, 0.0
  %v659 = vsel %vm627, %v564, 0.0
  %v660 = vsel %vm628, %v493, 0.0
  %v661 = vsel %vm629, %v495, 0.0
  %v662 = vsel %vm630, %v566, 0.0
  %v663 = vsel %vm631, %v568, 0.0
  %v664 = vsel %vm632, %v499, 0.0
  %v665 = vsel %vm633, %v501, 0.0
  %v666 = vsel %vm634, %v572, 0.0
  %v667 = vsel %vm635, %v574, 0.0
  %v668 = vsel %vm636, %v503, 0.0
  %v669 = vsel %vm637, %v505, 0.0
  %v670 = vsel %vm638, %v576, 0.0
  %v671 = vsel %vm639, %v578, 0.0
  %v672 = vsel %vm640, %v509, 0.0
  %v673 = vsel %vm641, %v511, 0.0
  %v674 = vsel %vm642, %v582, 0.0
  %v675 = vsel %vm643, %v584, 0.0
  %v676 = vsel %vm644, %v513, 0.0
  %v677 = vsel %vm645, %v515, 0.0
  %v678 = vsel %vm646, %v586, 0.0
  %v679 = vsel %vm647, %v588, 0.0
  %v680 = vshra.s32 %v600, 5
  %vm681 = vcmp.eq.s32.totalorder %v680, %v591
  %v682 = vsel %vm681, 1, 0
  %v683 = vcvt.s32.f32 %v682
  %vm684 = vcmask 523264
  %v686 = vsel %vm684, %v683, 0
  %688 = vmatprep.subr.mxu0 %v649
  %689 = vmatpush1.msra.mxu0 %v648
  %690 = vmatprep.subr.mxu0 %v653
  %691 = vmatpush1.msra.mxu0 %v652
  %692 = vmatprep.subr.mxu0 %v657
  %693 = vmatpush1.msra.mxu0 %v656
  %694 = vmatprep.subr.mxu0 %v661
  %695 = vmatpush1.msra.mxu0 %v660
  %696 = vmatprep.subr.mxu0 %v665
  %697 = vmatpush1.msra.mxu0 %v664
  %698 = vmatprep.subr.mxu0 %v669
  %699 = vmatpush1.msra.mxu0 %v668
  %700 = vmatprep.subr.mxu0 %v673
  %701 = vmatpush1.msra.mxu0 %v672
  %702 = vmatprep.subr.mxu0 %v677
  %703 = vmatpush1.msra.mxu0 %v676
  %704 = vmatprep.subr.mxu0 0.0
  %705 = vmatpush1.msra.mxu0 0.0
  %706 = vmatprep.subr.mxu0 0.0
  %707 = vmatpush1.msra.mxu0 0.0
  %708 = vmatprep.subr.mxu0 0.0
  %709 = vmatpush1.msra.mxu0 0.0
  %710 = vmatprep.subr.mxu0 0.0
  %711 = vmatpush1.msra.mxu0 0.0
  %712 = vmatprep.subr.mxu0 0.0
  %713 = vmatpush1.msra.mxu0 0.0
  %714 = vmatprep.subr.mxu0 0.0
  %715 = vmatpush1.msra.mxu0 0.0
  %716 = vmatprep.subr.mxu0 0.0
  %717 = vmatpush1.msra.mxu0 0.0
  %718 = vmatprep.subr.mxu0 0.0
  %719 = vmatpush1.msra.mxu0 0.0
  %720 = vmatprep.subr.mxu0 0.0
  %721 = vmatpush1.msra.mxu0 0.0
  %722 = vmatprep.subr.mxu0 0.0
  %723 = vmatpush1.msra.mxu0 0.0
  %724 = vmatprep.subr.mxu0 0.0
  %725 = vmatpush1.msra.mxu0 0.0
  %726 = vmatprep.subr.mxu0 0.0
  %727 = vmatpush1.msra.mxu0 0.0
  %728 = vmatprep.subr.mxu0 0.0
  %729 = vmatpush1.msra.mxu0 0.0
  %730 = vmatprep.subr.mxu0 0.0
  %731 = vmatpush1.msra.mxu0 0.0
  %732 = vmatprep.subr.mxu0 0.0
  %733 = vmatpush1.msra.mxu0 0.0
  %734 = vmatprep.subr.mxu0 0.0
  %735 = vmatpush1.msra.mxu0 0.0
  %736 = vmatprep.subr.mxu0 0.0
  %737 = vmatpush1.msra.mxu0 0.0
  %738 = vmatprep.subr.mxu0 0.0
  %739 = vmatpush1.msra.mxu0 0.0
  %740 = vmatprep.subr.mxu0 0.0
  %741 = vmatpush1.msra.mxu0 0.0
  %742 = vmatprep.subr.mxu0 0.0
  %743 = vmatpush1.msra.mxu0 0.0
  %744 = vmatprep.subr.mxu0 0.0
  %745 = vmatpush1.msra.mxu0 0.0
  %746 = vmatprep.subr.mxu0 0.0
  %747 = vmatpush1.msra.mxu0 0.0
  %748 = vmatprep.subr.mxu0 0.0
  %749 = vmatpush1.msra.mxu0 0.0
  %750 = vmatprep.subr.mxu0 0.0
  %751 = vmatpush1.msra.mxu0 0.0
  %752 = vmatprep.mubr.f32.mxu0 0.0
  %753 = vmatmul.mubr.f32.gmra.mrb[0].mxu0 %v686
  %v754 = vpop.f32.mrb[0].mxu0
  %v755 = vadd.f32 0.0, %v754
  %v756 = vpop.f32.mrb[0].mxu0
  %v757 = vadd.f32 0.0, %v756
  %758 = vdwg.mxu0
  %759 = vmatprep.subr.mxu0 %v651
  %760 = vmatpush1.msra.mxu0 %v650
  %761 = vmatprep.subr.mxu0 %v655
  %762 = vmatpush1.msra.mxu0 %v654
  %763 = vmatprep.subr.mxu0 %v659
  %764 = vmatpush1.msra.mxu0 %v658
  %765 = vmatprep.subr.mxu0 %v663
  %766 = vmatpush1.msra.mxu0 %v662
  %767 = vmatprep.subr.mxu0 %v667
  %768 = vmatpush1.msra.mxu0 %v666
  %769 = vmatprep.subr.mxu0 %v671
  %770 = vmatpush1.msra.mxu0 %v670
  %771 = vmatprep.subr.mxu0 %v675
  %772 = vmatpush1.msra.mxu0 %v674
  %773 = vmatprep.subr.mxu0 %v679
  %774 = vmatpush1.msra.mxu0 %v678
  %775 = vmatprep.subr.mxu0 0.0
  %776 = vmatpush1.msra.mxu0 0.0
  %777 = vmatprep.subr.mxu0 0.0
  %778 = vmatpush1.msra.mxu0 0.0
  %779 = vmatprep.subr.mxu0 0.0
  %780 = vmatpush1.msra.mxu0 0.0
  %781 = vmatprep.subr.mxu0 0.0
  %782 = vmatpush1.msra.mxu0 0.0
  %783 = vmatprep.subr.mxu0 0.0
  %784 = vmatpush1.msra.mxu0 0.0
  %785 = vmatprep.subr.mxu0 0.0
  %786 = vmatpush1.msra.mxu0 0.0
  %787 = vmatprep.subr.mxu0 0.0
  %788 = vmatpush1.msra.mxu0 0.0
  %789 = vmatprep.subr.mxu0 0.0
  %790 = vmatpush1.msra.mxu0 0.0
  %791 = vmatprep.subr.mxu0 0.0
  %792 = vmatpush1.msra.mxu0 0.0
  %793 = vmatprep.subr.mxu0 0.0
  %794 = vmatpush1.msra.mxu0 0.0
  %795 = vmatprep.subr.mxu0 0.0
  %796 = vmatpush1.msra.mxu0 0.0
  %797 = vmatprep.subr.mxu0 0.0
  %798 = vmatpush1.msra.mxu0 0.0
  %799 = vmatprep.subr.mxu0 0.0
  %800 = vmatpush1.msra.mxu0 0.0
  %801 = vmatprep.subr.mxu0 0.0
  %802 = vmatpush1.msra.mxu0 0.0
  %803 = vmatprep.subr.mxu0 0.0
  %804 = vmatpush1.msra.mxu0 0.0
  %805 = vmatprep.subr.mxu0 0.0
  %806 = vmatpush1.msra.mxu0 0.0
  %807 = vmatprep.subr.mxu0 0.0
  %808 = vmatpush1.msra.mxu0 0.0
  %809 = vmatprep.subr.mxu0 0.0
  %810 = vmatpush1.msra.mxu0 0.0
  %811 = vmatprep.subr.mxu0 0.0
  %812 = vmatpush1.msra.mxu0 0.0
  %813 = vmatprep.subr.mxu0 0.0
  %814 = vmatpush1.msra.mxu0 0.0
  %815 = vmatprep.subr.mxu0 0.0
  %816 = vmatpush1.msra.mxu0 0.0
  %817 = vmatprep.subr.mxu0 0.0
  %818 = vmatpush1.msra.mxu0 0.0
  %819 = vmatprep.subr.mxu0 0.0
  %820 = vmatpush1.msra.mxu0 0.0
  %821 = vmatprep.subr.mxu0 0.0
  %822 = vmatpush1.msra.mxu0 0.0
  %823 = vmatprep.mubr.f32.mxu0 0.0
  %824 = vmatmul.mubr.f32.gmra.mrb[0].mxu0 %v686
  %v825 = vpop.f32.mrb[0].mxu0
  %v826 = vadd.f32 0.0, %v825
  %v827 = vpop.f32.mrb[0].mxu0
  %v828 = vadd.f32 0.0, %v827
  %829 = vdwg.mxu0
  %v830 = vadd.s32 %v591, 64
  %v831 = vadd.s32 %v591, 72
  %v832 = vadd.s32 %v591, 80
  %v833 = vadd.s32 %v591, 88
  %v834 = vadd.s32 %v591, 96
  %v835 = vadd.s32 %v591, 104
  %v836 = vadd.s32 %v591, 112
  %v837 = vadd.s32 %v591, 120
  %v838 = vadd.s32 %v591, 128
  %v839 = vadd.s32 %v591, 136
  %v840 = vadd.s32 %v591, 144
  %v841 = vadd.s32 %v591, 152
  %v842 = vadd.s32 %v591, 160
  %v843 = vadd.s32 %v591, 168
  %v844 = vadd.s32 %v591, 176
  %v845 = vadd.s32 %v591, 184
  %v846 = vadd.s32 %v591, 192
  %v847 = vadd.s32 %v591, 200
  %v848 = vadd.s32 %v591, 208
  %v849 = vadd.s32 %v591, 216
  %v850 = vadd.s32 %v591, 224
  %v851 = vadd.s32 %v591, 232
  %v852 = vadd.s32 %v591, 240
  %v853 = vadd.s32 %v591, 248
  %v854 = vadd.s32 %v591, 256
  %v855 = vadd.s32 %v591, 264
  %v856 = vadd.s32 %v591, 272
  %v857 = vadd.s32 %v591, 280
  %v858 = vadd.s32 %v591, 288
  %v859 = vadd.s32 %v591, 296
  %v860 = vadd.s32 %v591, 304
  %v861 = vadd.s32 %v591, 312
  %v862 = vadd.s32 %v591, 320
  %v863 = vadd.s32 %v591, 328
  %v864 = vadd.s32 %v591, 336
  %v865 = vadd.s32 %v591, 344
  %v866 = vadd.s32 %v591, 352
  %v867 = vadd.s32 %v591, 360
  %v868 = vadd.s32 %v591, 368
  %v869 = vadd.s32 %v591, 376
  %v870 = vadd.s32 %v591, 384
  %v871 = vadd.s32 %v591, 392
  %v872 = vadd.s32 %v591, 400
  %v873 = vadd.s32 %v591, 408
  %v874 = vadd.s32 %v591, 416
  %v875 = vadd.s32 %v591, 424
  %v876 = vadd.s32 %v591, 432
  %v877 = vadd.s32 %v591, 440
  %v878 = vadd.s32 %v591, 448
  %v879 = vadd.s32 %v591, 456
  %v880 = vadd.s32 %v591, 464
  %v881 = vadd.s32 %v591, 472
  %v882 = vadd.s32 %v591, 480
  %v883 = vadd.s32 %v591, 488
  %v884 = vadd.s32 %v591, 496
  %v885 = vadd.s32 %v591, 504
  %v886 = vand.u32 %v591, 15
  %v887 = vand.u32 %v592, 15
  %v888 = vand.u32 %v593, 15
  %v889 = vand.u32 %v594, 15
  %v890 = vand.u32 %v595, 15
  %v891 = vand.u32 %v596, 15
  %v892 = vand.u32 %v597, 15
  %v893 = vand.u32 %v598, 15
  %v894 = vand.u32 %v830, 15
  %v895 = vand.u32 %v831, 15
  %v896 = vand.u32 %v832, 15
  %v897 = vand.u32 %v833, 15
  %v898 = vand.u32 %v834, 15
  %v899 = vand.u32 %v835, 15
  %v900 = vand.u32 %v836, 15
  %v901 = vand.u32 %v837, 15
  %v902 = vand.u32 %v838, 15
  %v903 = vand.u32 %v839, 15
  %v904 = vand.u32 %v840, 15
  %v905 = vand.u32 %v841, 15
  %v906 = vand.u32 %v842, 15
  %v907 = vand.u32 %v843, 15
  %v908 = vand.u32 %v844, 15
  %v909 = vand.u32 %v845, 15
  %v910 = vand.u32 %v846, 15
  %v911 = vand.u32 %v847, 15
  %v912 = vand.u32 %v848, 15
  %v913 = vand.u32 %v849, 15
  %v914 = vand.u32 %v850, 15
  %v915 = vand.u32 %v851, 15
  %v916 = vand.u32 %v852, 15
  %v917 = vand.u32 %v853, 15
  %v918 = vand.u32 %v854, 15
  %v919 = vand.u32 %v855, 15
  %v920 = vand.u32 %v856, 15
  %v921 = vand.u32 %v857, 15
  %v922 = vand.u32 %v858, 15
  %v923 = vand.u32 %v859, 15
  %v924 = vand.u32 %v860, 15
  %v925 = vand.u32 %v861, 15
  %v926 = vand.u32 %v862, 15
  %v927 = vand.u32 %v863, 15
  %v928 = vand.u32 %v864, 15
  %v929 = vand.u32 %v865, 15
  %v930 = vand.u32 %v866, 15
  %v931 = vand.u32 %v867, 15
  %v932 = vand.u32 %v868, 15
  %v933 = vand.u32 %v869, 15
  %v934 = vand.u32 %v870, 15
  %v935 = vand.u32 %v871, 15
  %v936 = vand.u32 %v872, 15
  %v937 = vand.u32 %v873, 15
  %v938 = vand.u32 %v874, 15
  %v939 = vand.u32 %v875, 15
  %v940 = vand.u32 %v876, 15
  %v941 = vand.u32 %v877, 15
  %v942 = vand.u32 %v878, 15
  %v943 = vand.u32 %v879, 15
  %v944 = vand.u32 %v880, 15
  %v945 = vand.u32 %v881, 15
  %v946 = vand.u32 %v882, 15
  %v947 = vand.u32 %v883, 15
  %v948 = vand.u32 %v884, 15
  %v949 = vand.u32 %v885, 15
  %vm950 = vcmp.eq.s32.totalorder %v886, %v600
  %vm951 = vcmp.eq.s32.totalorder %v887, %v600
  %vm952 = vcmp.eq.s32.totalorder %v888, %v600
  %vm953 = vcmp.eq.s32.totalorder %v889, %v600
  %vm954 = vcmp.eq.s32.totalorder %v890, %v600
  %vm955 = vcmp.eq.s32.totalorder %v891, %v600
  %vm956 = vcmp.eq.s32.totalorder %v892, %v600
  %vm957 = vcmp.eq.s32.totalorder %v893, %v600
  %vm958 = vcmp.eq.s32.totalorder %v894, %v600
  %vm959 = vcmp.eq.s32.totalorder %v895, %v600
  %vm960 = vcmp.eq.s32.totalorder %v896, %v600
  %vm961 = vcmp.eq.s32.totalorder %v897, %v600
  %vm962 = vcmp.eq.s32.totalorder %v898, %v600
  %vm963 = vcmp.eq.s32.totalorder %v899, %v600
  %vm964 = vcmp.eq.s32.totalorder %v900, %v600
  %vm965 = vcmp.eq.s32.totalorder %v901, %v600
  %vm966 = vcmp.eq.s32.totalorder %v902, %v600
  %vm967 = vcmp.eq.s32.totalorder %v903, %v600
  %vm968 = vcmp.eq.s32.totalorder %v904, %v600
  %vm969 = vcmp.eq.s32.totalorder %v905, %v600
  %vm970 = vcmp.eq.s32.totalorder %v906, %v600
  %vm971 = vcmp.eq.s32.totalorder %v907, %v600
  %vm972 = vcmp.eq.s32.totalorder %v908, %v600
  %vm973 = vcmp.eq.s32.totalorder %v909, %v600
  %vm974 = vcmp.eq.s32.totalorder %v910, %v600
  %vm975 = vcmp.eq.s32.totalorder %v911, %v600
  %vm976 = vcmp.eq.s32.totalorder %v912, %v600
  %vm977 = vcmp.eq.s32.totalorder %v913, %v600
  %vm978 = vcmp.eq.s32.totalorder %v914, %v600
  %vm979 = vcmp.eq.s32.totalorder %v915, %v600
  %vm980 = vcmp.eq.s32.totalorder %v916, %v600
  %vm981 = vcmp.eq.s32.totalorder %v917, %v600
  %vm982 = vcmp.eq.s32.totalorder %v918, %v600
  %vm983 = vcmp.eq.s32.totalorder %v919, %v600
  %vm984 = vcmp.eq.s32.totalorder %v920, %v600
  %vm985 = vcmp.eq.s32.totalorder %v921, %v600
  %vm986 = vcmp.eq.s32.totalorder %v922, %v600
  %vm987 = vcmp.eq.s32.totalorder %v923, %v600
  %vm988 = vcmp.eq.s32.totalorder %v924, %v600
  %vm989 = vcmp.eq.s32.totalorder %v925, %v600
  %vm990 = vcmp.eq.s32.totalorder %v926, %v600
  %vm991 = vcmp.eq.s32.totalorder %v927, %v600
  %vm992 = vcmp.eq.s32.totalorder %v928, %v600
  %vm993 = vcmp.eq.s32.totalorder %v929, %v600
  %vm994 = vcmp.eq.s32.totalorder %v930, %v600
  %vm995 = vcmp.eq.s32.totalorder %v931, %v600
  %vm996 = vcmp.eq.s32.totalorder %v932, %v600
  %vm997 = vcmp.eq.s32.totalorder %v933, %v600
  %vm998 = vcmp.eq.s32.totalorder %v934, %v600
  %vm999 = vcmp.eq.s32.totalorder %v935, %v600
  %vm1000 = vcmp.eq.s32.totalorder %v936, %v600
  %vm1001 = vcmp.eq.s32.totalorder %v937, %v600
  %vm1002 = vcmp.eq.s32.totalorder %v938, %v600
  %vm1003 = vcmp.eq.s32.totalorder %v939, %v600
  %vm1004 = vcmp.eq.s32.totalorder %v940, %v600
  %vm1005 = vcmp.eq.s32.totalorder %v941, %v600
  %vm1006 = vcmp.eq.s32.totalorder %v942, %v600
  %vm1007 = vcmp.eq.s32.totalorder %v943, %v600
  %vm1008 = vcmp.eq.s32.totalorder %v944, %v600
  %vm1009 = vcmp.eq.s32.totalorder %v945, %v600
  %vm1010 = vcmp.eq.s32.totalorder %v946, %v600
  %vm1011 = vcmp.eq.s32.totalorder %v947, %v600
  %vm1012 = vcmp.eq.s32.totalorder %v948, %v600
  %vm1013 = vcmp.eq.s32.totalorder %v949, %v600
  %v1014 = vsel %vm950, 1, 0
  %v1015 = vsel %vm951, 1, 0
  %v1016 = vsel %vm952, 1, 0
  %v1017 = vsel %vm953, 1, 0
  %v1018 = vsel %vm954, 1, 0
  %v1019 = vsel %vm955, 1, 0
  %v1020 = vsel %vm956, 1, 0
  %v1021 = vsel %vm957, 1, 0
  %v1022 = vsel %vm958, 1, 0
  %v1023 = vsel %vm959, 1, 0
  %v1024 = vsel %vm960, 1, 0
  %v1025 = vsel %vm961, 1, 0
  %v1026 = vsel %vm962, 1, 0
  %v1027 = vsel %vm963, 1, 0
  %v1028 = vsel %vm964, 1, 0
  %v1029 = vsel %vm965, 1, 0
  %v1030 = vsel %vm966, 1, 0
  %v1031 = vsel %vm967, 1, 0
  %v1032 = vsel %vm968, 1, 0
  %v1033 = vsel %vm969, 1, 0
  %v1034 = vsel %vm970, 1, 0
  %v1035 = vsel %vm971, 1, 0
  %v1036 = vsel %vm972, 1, 0
  %v1037 = vsel %vm973, 1, 0
  %v1038 = vsel %vm974, 1, 0
  %v1039 = vsel %vm975, 1, 0
  %v1040 = vsel %vm976, 1, 0
  %v1041 = vsel %vm977, 1, 0
  %v1042 = vsel %vm978, 1, 0
  %v1043 = vsel %vm979, 1, 0
  %v1044 = vsel %vm980, 1, 0
  %v1045 = vsel %vm981, 1, 0
  %v1046 = vsel %vm982, 1, 0
  %v1047 = vsel %vm983, 1, 0
  %v1048 = vsel %vm984, 1, 0
  %v1049 = vsel %vm985, 1, 0
  %v1050 = vsel %vm986, 1, 0
  %v1051 = vsel %vm987, 1, 0
  %v1052 = vsel %vm988, 1, 0
  %v1053 = vsel %vm989, 1, 0
  %v1054 = vsel %vm990, 1, 0
  %v1055 = vsel %vm991, 1, 0
  %v1056 = vsel %vm992, 1, 0
  %v1057 = vsel %vm993, 1, 0
  %v1058 = vsel %vm994, 1, 0
  %v1059 = vsel %vm995, 1, 0
  %v1060 = vsel %vm996, 1, 0
  %v1061 = vsel %vm997, 1, 0
  %v1062 = vsel %vm998, 1, 0
  %v1063 = vsel %vm999, 1, 0
  %v1064 = vsel %vm1000, 1, 0
  %v1065 = vsel %vm1001, 1, 0
  %v1066 = vsel %vm1002, 1, 0
  %v1067 = vsel %vm1003, 1, 0
  %v1068 = vsel %vm1004, 1, 0
  %v1069 = vsel %vm1005, 1, 0
  %v1070 = vsel %vm1006, 1, 0
  %v1071 = vsel %vm1007, 1, 0
  %v1072 = vsel %vm1008, 1, 0
  %v1073 = vsel %vm1009, 1, 0
  %v1074 = vsel %vm1010, 1, 0
  %v1075 = vsel %vm1011, 1, 0
  %v1076 = vsel %vm1012, 1, 0
  %v1077 = vsel %vm1013, 1, 0
  %v1078 = vcvt.s32.f32 %v1014
  %v1079 = vcvt.s32.f32 %v1015
  %v1080 = vcvt.s32.f32 %v1016
  %v1081 = vcvt.s32.f32 %v1017
  %v1082 = vcvt.s32.f32 %v1018
  %v1083 = vcvt.s32.f32 %v1019
  %v1084 = vcvt.s32.f32 %v1020
  %v1085 = vcvt.s32.f32 %v1021
  %v1086 = vcvt.s32.f32 %v1022
  %v1087 = vcvt.s32.f32 %v1023
  %v1088 = vcvt.s32.f32 %v1024
  %v1089 = vcvt.s32.f32 %v1025
  %v1090 = vcvt.s32.f32 %v1026
  %v1091 = vcvt.s32.f32 %v1027
  %v1092 = vcvt.s32.f32 %v1028
  %v1093 = vcvt.s32.f32 %v1029
  %v1094 = vcvt.s32.f32 %v1030
  %v1095 = vcvt.s32.f32 %v1031
  %v1096 = vcvt.s32.f32 %v1032
  %v1097 = vcvt.s32.f32 %v1033
  %v1098 = vcvt.s32.f32 %v1034
  %v1099 = vcvt.s32.f32 %v1035
  %v1100 = vcvt.s32.f32 %v1036
  %v1101 = vcvt.s32.f32 %v1037
  %v1102 = vcvt.s32.f32 %v1038
  %v1103 = vcvt.s32.f32 %v1039
  %v1104 = vcvt.s32.f32 %v1040
  %v1105 = vcvt.s32.f32 %v1041
  %v1106 = vcvt.s32.f32 %v1042
  %v1107 = vcvt.s32.f32 %v1043
  %v1108 = vcvt.s32.f32 %v1044
  %v1109 = vcvt.s32.f32 %v1045
  %v1110 = vcvt.s32.f32 %v1046
  %v1111 = vcvt.s32.f32 %v1047
  %v1112 = vcvt.s32.f32 %v1048
  %v1113 = vcvt.s32.f32 %v1049
  %v1114 = vcvt.s32.f32 %v1050
  %v1115 = vcvt.s32.f32 %v1051
  %v1116 = vcvt.s32.f32 %v1052
  %v1117 = vcvt.s32.f32 %v1053
  %v1118 = vcvt.s32.f32 %v1054
  %v1119 = vcvt.s32.f32 %v1055
  %v1120 = vcvt.s32.f32 %v1056
  %v1121 = vcvt.s32.f32 %v1057
  %v1122 = vcvt.s32.f32 %v1058
  %v1123 = vcvt.s32.f32 %v1059
  %v1124 = vcvt.s32.f32 %v1060
  %v1125 = vcvt.s32.f32 %v1061
  %v1126 = vcvt.s32.f32 %v1062
  %v1127 = vcvt.s32.f32 %v1063
  %v1128 = vcvt.s32.f32 %v1064
  %v1129 = vcvt.s32.f32 %v1065
  %v1130 = vcvt.s32.f32 %v1066
  %v1131 = vcvt.s32.f32 %v1067
  %v1132 = vcvt.s32.f32 %v1068
  %v1133 = vcvt.s32.f32 %v1069
  %v1134 = vcvt.s32.f32 %v1070
  %v1135 = vcvt.s32.f32 %v1071
  %v1136 = vcvt.s32.f32 %v1072
  %v1137 = vcvt.s32.f32 %v1073
  %v1138 = vcvt.s32.f32 %v1074
  %v1139 = vcvt.s32.f32 %v1075
  %v1140 = vcvt.s32.f32 %v1076
  %v1141 = vcvt.s32.f32 %v1077
  %v1142 = vld [vmem:[%s3] sm:$0x1]
  %v1144 = vlaneseq
  %v1145 = vshrl.u32 %v1144, 7
  %v1146 = vsub.s32 0, %v1145
  %v1147 = vrot.slane %v1142, %v1146
  %1149 = vmatprep.subr.mxu0 0.0
  %1150 = vmatpush1.msra.mxu0 %v1078
  %1151 = vmatprep.subr.mxu0 0.0
  %1152 = vmatpush1.msra.mxu0 %v1079
  %1153 = vmatprep.subr.mxu0 0.0
  %1154 = vmatpush1.msra.mxu0 %v1080
  %1155 = vmatprep.subr.mxu0 0.0
  %1156 = vmatpush1.msra.mxu0 %v1081
  %1157 = vmatprep.subr.mxu0 0.0
  %1158 = vmatpush1.msra.mxu0 %v1082
  %1159 = vmatprep.subr.mxu0 0.0
  %1160 = vmatpush1.msra.mxu0 %v1083
  %1161 = vmatprep.subr.mxu0 0.0
  %1162 = vmatpush1.msra.mxu0 %v1084
  %1163 = vmatprep.subr.mxu0 0.0
  %1164 = vmatpush1.msra.mxu0 %v1085
  %1165 = vmatprep.subr.mxu0 0.0
  %1166 = vmatpush1.msra.mxu0 %v1086
  %1167 = vmatprep.subr.mxu0 0.0
  %1168 = vmatpush1.msra.mxu0 %v1087
  %1169 = vmatprep.subr.mxu0 0.0
  %1170 = vmatpush1.msra.mxu0 %v1088
  %1171 = vmatprep.subr.mxu0 0.0
  %1172 = vmatpush1.msra.mxu0 %v1089
  %1173 = vmatprep.subr.mxu0 0.0
  %1174 = vmatpush1.msra.mxu0 %v1090
  %1175 = vmatprep.subr.mxu0 0.0
  %1176 = vmatpush1.msra.mxu0 %v1091
  %1177 = vmatprep.subr.mxu0 0.0
  %1178 = vmatpush1.msra.mxu0 %v1092
  %1179 = vmatprep.subr.mxu0 0.0
  %1180 = vmatpush1.msra.mxu0 %v1093
  %1181 = vmatprep.subr.mxu0 0.0
  %1182 = vmatpush1.msra.mxu0 %v1094
  %1183 = vmatprep.subr.mxu0 0.0
  %1184 = vmatpush1.msra.mxu0 %v1095
  %1185 = vmatprep.subr.mxu0 0.0
  %1186 = vmatpush1.msra.mxu0 %v1096
  %1187 = vmatprep.subr.mxu0 0.0
  %1188 = vmatpush1.msra.mxu0 %v1097
  %1189 = vmatprep.subr.mxu0 0.0
  %1190 = vmatpush1.msra.mxu0 %v1098
  %1191 = vmatprep.subr.mxu0 0.0
  %1192 = vmatpush1.msra.mxu0 %v1099
  %1193 = vmatprep.subr.mxu0 0.0
  %1194 = vmatpush1.msra.mxu0 %v1100
  %1195 = vmatprep.subr.mxu0 0.0
  %1196 = vmatpush1.msra.mxu0 %v1101
  %1197 = vmatprep.subr.mxu0 0.0
  %1198 = vmatpush1.msra.mxu0 %v1102
  %1199 = vmatprep.subr.mxu0 0.0
  %1200 = vmatpush1.msra.mxu0 %v1103
  %1201 = vmatprep.subr.mxu0 0.0
  %1202 = vmatpush1.msra.mxu0 %v1104
  %1203 = vmatprep.subr.mxu0 0.0
  %1204 = vmatpush1.msra.mxu0 %v1105
  %1205 = vmatprep.subr.mxu0 0.0
  %1206 = vmatpush1.msra.mxu0 %v1106
  %1207 = vmatprep.subr.mxu0 0.0
  %1208 = vmatpush1.msra.mxu0 %v1107
  %1209 = vmatprep.subr.mxu0 0.0
  %1210 = vmatpush1.msra.mxu0 %v1108
  %1211 = vmatprep.subr.mxu0 0.0
  %1212 = vmatpush1.msra.mxu0 %v1109
  %1213 = vmatprep.mubr.f32.mxu0 %v757
  %1214 = vmatmul.mubr.f32.gmra.mrb[0].mxu0 %v755
  %v1215 = vpop.f32.mrb[0].mxu0
  %v1216 = vadd.f32 %v1147, %v1215
  %v1217 = vpop.f32.mrb[0].mxu0
  %1218 = vdwg.mxu0
  %1219 = vmatprep.subr.mxu0 0.0
  %1220 = vmatpush1.msra.mxu0 %v1110
  %1221 = vmatprep.subr.mxu0 0.0
  %1222 = vmatpush1.msra.mxu0 %v1111
  %1223 = vmatprep.subr.mxu0 0.0
  %1224 = vmatpush1.msra.mxu0 %v1112
  %1225 = vmatprep.subr.mxu0 0.0
  %1226 = vmatpush1.msra.mxu0 %v1113
  %1227 = vmatprep.subr.mxu0 0.0
  %1228 = vmatpush1.msra.mxu0 %v1114
  %1229 = vmatprep.subr.mxu0 0.0
  %1230 = vmatpush1.msra.mxu0 %v1115
  %1231 = vmatprep.subr.mxu0 0.0
  %1232 = vmatpush1.msra.mxu0 %v1116
  %1233 = vmatprep.subr.mxu0 0.0
  %1234 = vmatpush1.msra.mxu0 %v1117
  %1235 = vmatprep.subr.mxu0 0.0
  %1236 = vmatpush1.msra.mxu0 %v1118
  %1237 = vmatprep.subr.mxu0 0.0
  %1238 = vmatpush1.msra.mxu0 %v1119
  %1239 = vmatprep.subr.mxu0 0.0
  %1240 = vmatpush1.msra.mxu0 %v1120
  %1241 = vmatprep.subr.mxu0 0.0
  %1242 = vmatpush1.msra.mxu0 %v1121
  %1243 = vmatprep.subr.mxu0 0.0
  %1244 = vmatpush1.msra.mxu0 %v1122
  %1245 = vmatprep.subr.mxu0 0.0
  %1246 = vmatpush1.msra.mxu0 %v1123
  %1247 = vmatprep.subr.mxu0 0.0
  %1248 = vmatpush1.msra.mxu0 %v1124
  %1249 = vmatprep.subr.mxu0 0.0
  %1250 = vmatpush1.msra.mxu0 %v1125
  %1251 = vmatprep.subr.mxu0 0.0
  %1252 = vmatpush1.msra.mxu0 %v1126
  %1253 = vmatprep.subr.mxu0 0.0
  %1254 = vmatpush1.msra.mxu0 %v1127
  %1255 = vmatprep.subr.mxu0 0.0
  %1256 = vmatpush1.msra.mxu0 %v1128
  %1257 = vmatprep.subr.mxu0 0.0
  %1258 = vmatpush1.msra.mxu0 %v1129
  %1259 = vmatprep.subr.mxu0 0.0
  %1260 = vmatpush1.msra.mxu0 %v1130
  %1261 = vmatprep.subr.mxu0 0.0
  %1262 = vmatpush1.msra.mxu0 %v1131
  %1263 = vmatprep.subr.mxu0 0.0
  %1264 = vmatpush1.msra.mxu0 %v1132
  %1265 = vmatprep.subr.mxu0 0.0
  %1266 = vmatpush1.msra.mxu0 %v1133
  %1267 = vmatprep.subr.mxu0 0.0
  %1268 = vmatpush1.msra.mxu0 %v1134
  %1269 = vmatprep.subr.mxu0 0.0
  %1270 = vmatpush1.msra.mxu0 %v1135
  %1271 = vmatprep.subr.mxu0 0.0
  %1272 = vmatpush1.msra.mxu0 %v1136
  %1273 = vmatprep.subr.mxu0 0.0
  %1274 = vmatpush1.msra.mxu0 %v1137
  %1275 = vmatprep.subr.mxu0 0.0
  %1276 = vmatpush1.msra.mxu0 %v1138
  %1277 = vmatprep.subr.mxu0 0.0
  %1278 = vmatpush1.msra.mxu0 %v1139
  %1279 = vmatprep.subr.mxu0 0.0
  %1280 = vmatpush1.msra.mxu0 %v1140
  %1281 = vmatprep.subr.mxu0 0.0
  %1282 = vmatpush1.msra.mxu0 %v1141
  %1283 = vmatprep.mubr.f32.mxu0 %v828
  %1284 = vmatmul.mubr.f32.gmra.mrb[0].mxu0 %v826
  %v1285 = vpop.f32.mrb[0].mxu0
  %v1286 = vadd.f32 %v1216, %v1285
  %v1287 = vpop.f32.mrb[0].mxu0
  %1288 = vdwg.mxu0
  %1289 = vst [vmem:[%s4] sm:$0xff] %v1286
  // Predicated region
  $region18: #{image_cnn_forward.1} parent=0 // pred_check
    _
  $region19: #{image_cnn_forward.1} parent=0 // pred_check_branch
    %1291 = sbr.rel (0) target = $region21
  $region20: #{image_cnn_forward.1} parent=0 // pred_region
    _
  $region21: #{image_cnn_forward.1} parent=0 // pred_fallthru
    _
  // Predicated region
  $region22: #{image_cnn_forward.1} parent=0 // pred_check
    _
  $region23: #{image_cnn_forward.1} parent=0 // pred_check_branch
    %1293 = sbr.rel (0) target = $region25
  $region24: #{image_cnn_forward.1} parent=0 // pred_region
    _
  $region25: #{image_cnn_forward.1} parent=0 // pred_fallthru
    _

</llo_original>
